<compile_context>
chip_gen: v7x
topology: tpu7x:2x2x1
jax: 0.10.0
libtpu: 0.0.40
codegen_flags: <defaults>
</compile_context>

<pallas_src>
import functools
import math

import jax
import jax.numpy as jnp
from jax import lax
from jax.experimental import pallas as pl
from jax.experimental.pallas import tpu as pltpu

EPS = 1e-5

# 64 MiB scoped VMEM: fits v7x's 64 MiB physical budget; on v5e/v6e (128 MiB)
# this can be raised to ~96 MiB together with a larger _MAX_BLOCK_LANES.
_VMEM_LIMIT = 64 * 1024 * 1024
# Per-grid-step lane extent budget (channels x lanes blocks are double-buffered
# and call B holds a few f32 temporaries of the same size).
# TODO(synk): for very long single-sample L (W > budget) add intra-sample L
# tiling with a 1-column halo instead of whole-window blocks.
_MAX_BLOCK_LANES = 2048


def _choose_batch_tile(n, w_min, max_lanes=_MAX_BLOCK_LANES):
    """Pick (tb, w): tb samples per grid step, per-sample window width w.

    w is rounded up so tb*w is a multiple of 128 (lane-dense blocks, unmasked
    stores, MXU-friendly N dim).  Among candidates fitting the lane budget the
    widest block wins (amortizes ~0.35us/step overhead); ties prefer less pad.
    """
    fits, overflow = [], []
    for tb in range(1, n + 1):
        if n % tb:
            continue
        unit = 128 // math.gcd(tb, 128)
        w = ((w_min + unit - 1) // unit) * unit
        (fits if tb * w <= max_lanes else overflow).append((tb * w, -w, tb, w))
    if fits:
        _, _, tb, w = max(fits)
    else:
        _, _, tb, w = min(overflow)
    return tb, w


# --------------------------- call A: conv1 + BN1 stats -----------------------
def _conv1_kernel(xs_ref, w1_ref, mask_ref, h_ref, s1_ref, *, stride):
    """conv1 (stride folded into the phase-split input) + BN1 sum/sum_sq."""
    mask = mask_ref[...]                                   # (1, lanes) window validity
    if stride == 1:
        xc = xs_ref[0]                                     # (C_in, lanes) bf16
        x32 = xc.astype(jnp.float32)                       # shifts in f32 (safe relayout)
        h = jnp.dot(w1_ref[1], xc, preferred_element_type=jnp.float32)
        h += jnp.dot(w1_ref[0], jnp.roll(x32, 1, axis=1).astype(jnp.bfloat16),
                     preferred_element_type=jnp.float32)
        h += jnp.dot(w1_ref[2], jnp.roll(x32, -1, axis=1).astype(jnp.bfloat16),
                     preferred_element_type=jnp.float32)
    else:                                                  # stride == 2: [even, odd] phases
        xe = xs_ref[0]
        xo = xs_ref[1]
        xo32 = xo.astype(jnp.float32)
        h = jnp.dot(w1_ref[1], xe, preferred_element_type=jnp.float32)
        h += jnp.dot(w1_ref[2], xo, preferred_element_type=jnp.float32)
        h += jnp.dot(w1_ref[0], jnp.roll(xo32, 1, axis=1).astype(jnp.bfloat16),
                     preferred_element_type=jnp.float32)
    hm = h * mask                                          # zero halo / lane-pad columns
    h_ref[...] = hm.astype(h_ref.dtype)                    # bf16 inter-call intermediate

    @pl.when(pl.program_id(1) == 0)
    def _():
        s1_ref[...] = jnp.zeros(s1_ref.shape, s1_ref.dtype)
    # single-pass BN statistics in f32.
    # TODO(synk): switch to shifted/Welford accumulation if activations are far
    # from zero-mean (E[x^2]-E[x]^2 cancellation).
    s1_ref[0] += jnp.concatenate(
        [jnp.sum(hm, axis=1, keepdims=True),
         jnp.sum(hm * hm, axis=1, keepdims=True)], axis=1)          # (P, 2)


# ------------------ call B: BN1 + ReLU + conv2 + BN2 stats -------------------
def _conv2_kernel(h_ref, w2_ref, mask_ref, scale1_ref, shift1_ref, out_ref, s2_ref):
    """BN1 + ReLU + conv2 (bf16 MXU operands) + BN2 sum/sum_sq (f32)."""
    mask = mask_ref[...]                                             # (1, lanes)
    a = jnp.maximum(h_ref[...].astype(jnp.float32) * scale1_ref[...]
                    + shift1_ref[...], 0.0)
    a = a * mask           # re-zero halo columns (BN shift made them nonzero)
    out = jnp.dot(w2_ref[1], a.astype(jnp.bfloat16), preferred_element_type=jnp.float32)
    out += jnp.dot(w2_ref[0], jnp.roll(a, 1, axis=1).astype(jnp.bfloat16),
                   preferred_element_type=jnp.float32)
    out += jnp.dot(w2_ref[2], jnp.roll(a, -1, axis=1).astype(jnp.bfloat16),
                   preferred_element_type=jnp.float32)
    outm = out * mask
    out_ref[...] = outm.astype(out_ref.dtype)

    @pl.when(pl.program_id(1) == 0)
    def _():
        s2_ref[...] = jnp.zeros(s2_ref.shape, s2_ref.dtype)
    s2_ref[0] += jnp.concatenate(
        [jnp.sum(outm, axis=1, keepdims=True),
         jnp.sum(outm * outm, axis=1, keepdims=True)], axis=1)


# ------------- call C: BN2 + shortcut (pre-packed) + final ReLU --------------
def _bn2_res_kernel(out_ref, sc_ref, scale2_ref, shift2_ref, y_ref):
    y = out_ref[...].astype(jnp.float32) * scale2_ref[...] + shift2_ref[...]
    y = y + sc_ref[...].astype(jnp.float32)                # direct add, no embed matmul
    y_ref[...] = jnp.maximum(y, 0.0)


# --------------------------------- wrapper -----------------------------------
def _to_windows(a, w_win):
    """(N, C, Lv) -> (C, N*w_win): per-sample windows with valid data at window
    columns [1, 1+Lv) and zeros elsewhere (conv halo + lane padding)."""
    n, c, lv = a.shape
    a = jnp.pad(a, ((0, 0), (0, 0), (1, w_win - 1 - lv)))
    return jnp.transpose(a, (1, 0, 2)).reshape(c, n * w_win)


@functools.partial(jax.jit, static_argnames=("stride",))
def basic_block_forward(x, params, *, stride):
    """x: (N, C_in, L) float32 in PyTorch NCL. Returns (N, planes, L_out) NCL."""
    w1, g1, b1, w2, g2, b2 = (params[k] for k in ("w1", "g1", "b1", "w2", "g2", "b2"))
    n, c_in, l = x.shape
    planes = w1.shape[0]
    l_out = (l - 1) // stride + 1

    identity_shortcut = (stride == 1 and c_in == planes)
    if not identity_shortcut:
        padc = planes // 4
        assert stride == 2 and c_in + 2 * padc == planes, (
            "shortcut option A needs stride=2 and planes == c_in + 2*(planes//4)")

    # ---- lane-dense windowed layout -----------------------------------------
    tb, w_win = _choose_batch_tile(n, l_out + 2)
    tbw = tb * w_win                    # lane extent of every block (multiple of 128)
    steps = n // tb
    ncore = 2 if steps % 2 == 0 else 1  # v7x megacore split for calls A/B
    spc = steps // ncore

    x = x.astype(jnp.float32)
    if stride == 1:
        xs = _to_windows(x, w_win)[None]                                  # (1, C_in, N*W)
    else:
        xs = jnp.stack([_to_windows(x[:, :, 0::2], w_win),
                        _to_windows(x[:, :, 1::2], w_win)])               # (2, C_in, N*W)
    xs = xs.astype(jnp.bfloat16)

    if identity_shortcut:
        sc_src = x                                                        # (N, P, L)
    else:
        sc_src = jnp.pad(x[:, :, 0::2],
                         ((0, 0), (padc, planes - padc - c_in), (0, 0)))  # (N, P, L_out)
    sc_win = _to_windows(sc_src, w_win).astype(jnp.bfloat16)              # (P, N*W)

    # per-block window-validity mask: 1.0 at window columns [1, 1+L_out), else 0
    col = jnp.arange(w_win)
    mask = jnp.tile(((col >= 1) & (col < 1 + l_out)).astype(jnp.float32), tb)[None, :]

    # conv weights -> per-tap matmul layout, bf16 MXU operands
    w1_taps = jnp.transpose(w1, (2, 0, 1)).astype(jnp.bfloat16)           # (3, P, C_in)
    w2_taps = jnp.transpose(w2, (2, 0, 1)).astype(jnp.bfloat16)           # (3, P, P)
    g1, b1, g2, b2 = (t.astype(jnp.float32) for t in (g1, b1, g2, b2))

    cp_acc = pltpu.CompilerParams(dimension_semantics=("parallel", "arbitrary"),
                                  vmem_limit_bytes=_VMEM_LIMIT)
    cp_par = pltpu.CompilerParams(dimension_semantics=("parallel",),
                                  vmem_limit_bytes=_VMEM_LIMIT)
    # TODO(synk): if xprof shows exposed input DMA at large blocks, add
    # pipeline_mode=pl.Buffered(3) on the per-batch-tile in_specs.

    # ---- call A: conv1 + BN1 partial sums ------------------------------------
    h, s1 = pl.pallas_call(
        functools.partial(_conv1_kernel, stride=stride),
        grid=(ncore, spc),
        in_specs=[
            pl.BlockSpec((xs.shape[0], c_in, tbw), lambda p, i: (0, 0, p * spc + i)),
            pl.BlockSpec((3, planes, c_in), lambda p, i: (0, 0, 0)),
            pl.BlockSpec((1, tbw), lambda p, i: (0, 0)),
        ],
        out_specs=[
            pl.BlockSpec((planes, tbw), lambda p, i: (0, p * spc + i)),
            pl.BlockSpec((1, planes, 2), lambda p, i: (p, 0, 0)),  # per-core resident acc
        ],
        out_shape=[
            jax.ShapeDtypeStruct((planes, n * w_win), jnp.bfloat16),
            jax.ShapeDtypeStruct((ncore, planes, 2), jnp.float32),
        ],
        compiler_params=cp_acc,
    )(xs, w1_taps, mask)

    cnt = jnp.float32(n * l_out)
    s1 = s1.sum(axis=0)
    mean1 = s1[:, 0] / cnt
    var1 = s1[:, 1] / cnt - mean1 * mean1                  # biased var (PyTorch BN fwd)
    inv1 = g1 * lax.rsqrt(var1 + EPS)
    scale1 = inv1.reshape(planes, 1)
    shift1 = (b1 - mean1 * inv1).reshape(planes, 1)

    # ---- call B: BN1 + ReLU + conv2 + BN2 partial sums -----------------------
    out, s2 = pl.pallas_call(
        _conv2_kernel,
        grid=(ncore, spc),
        in_specs=[
            pl.BlockSpec((planes, tbw), lambda p, i: (0, p * spc + i)),
            pl.BlockSpec((3, planes, planes), lambda p, i: (0, 0, 0)),
            pl.BlockSpec((1, tbw), lambda p, i: (0, 0)),
            pl.BlockSpec((planes, 1), lambda p, i: (0, 0)),
            pl.BlockSpec((planes, 1), lambda p, i: (0, 0)),
        ],
        out_specs=[
            pl.BlockSpec((planes, tbw), lambda p, i: (0, p * spc + i)),
            pl.BlockSpec((1, planes, 2), lambda p, i: (p, 0, 0)),
        ],
        out_shape=[
            jax.ShapeDtypeStruct((planes, n * w_win), jnp.bfloat16),
            jax.ShapeDtypeStruct((ncore, planes, 2), jnp.float32),
        ],
        compiler_params=cp_acc,
    )(h, w2_taps, mask, scale1, shift1)

    s2 = s2.sum(axis=0)
    mean2 = s2[:, 0] / cnt
    var2 = s2[:, 1] / cnt - mean2 * mean2
    inv2 = g2 * lax.rsqrt(var2 + EPS)
    scale2 = inv2.reshape(planes, 1)
    shift2 = (b2 - mean2 * inv2).reshape(planes, 1)

    # ---- call C: BN2 + shortcut + ReLU (fully 'parallel' over batch tiles) ---
    y = pl.pallas_call(
        _bn2_res_kernel,
        grid=(steps,),
        in_specs=[
            pl.BlockSpec((planes, tbw), lambda i: (0, i)),
            pl.BlockSpec((planes, tbw), lambda i: (0, i)),
            pl.BlockSpec((planes, 1), lambda i: (0, 0)),
            pl.BlockSpec((planes, 1), lambda i: (0, 0)),
        ],
        out_specs=pl.BlockSpec((planes, tbw), lambda i: (0, i)),
        out_shape=jax.ShapeDtypeStruct((planes, n * w_win), jnp.float32),
        compiler_params=cp_par,
    )(out, sc_win, scale2, shift2)

    # back to PyTorch NCL: (P, N*W) -> (N, P, L_out), dropping halo/pad columns
    y = y.reshape(planes, n, w_win).transpose(1, 0, 2)[:, :, 1:1 + l_out]
    return y


# ----------------------------- pure-JAX reference ----------------------------
def basic_block_ref(x, params, *, stride):
    w1, g1, b1, w2, g2, b2 = (params[k] for k in ("w1", "g1", "b1", "w2", "g2", "b2"))
    c_in, planes = x.shape[1], w1.shape[0]

    def conv1d(h, w, s):
        return lax.conv_general_dilated(
            h, w, window_strides=(s,), padding=((1, 1),),
            dimension_numbers=("NCH", "OIH", "NCH"))

    def bn(h, g, b):                    # training-mode BN (batch stats, biased var)
        mean = h.mean(axis=(0, 2), keepdims=True)
        var = ((h - mean) ** 2).mean(axis=(0, 2), keepdims=True)
        return (h - mean) / jnp.sqrt(var + EPS) * g[None, :, None] + b[None, :, None]

    out = jax.nn.relu(bn(conv1d(x, w1, stride), g1, b1))
    out = bn(conv1d(out, w2, 1), g2, b2)
    if stride != 1 or c_in != planes:
        sc = jnp.pad(x[:, :, ::2], ((0, 0), (planes // 4, planes // 4), (0, 0)))
    else:
        sc = x
    return jax.nn.relu(out + sc)


def _make_params(key, c_in, planes):
    k1, k2, k3, k4, k5, k6 = jax.random.split(key, 6)
    return {
        "w1": 0.2 * jax.random.normal(k1, (planes, c_in, 3), jnp.float32),
        "g1": 1.0 + 0.1 * jax.random.normal(k2, (planes,), jnp.float32),
        "b1": 0.05 * jax.random.normal(k3, (planes,), jnp.float32),
        "w2": 0.2 * jax.random.normal(k4, (planes, planes, 3), jnp.float32),
        "g2": 1.0 + 0.1 * jax.random.normal(k5, (planes,), jnp.float32),
        "b2": 0.05 * jax.random.normal(k6, (planes,), jnp.float32),
    }


if __name__ == "__main__":
    key = jax.random.PRNGKey(0)
    k_pa, k_pb, k_xa, k_xb = jax.random.split(key, 4)

    # bf16 MXU operands / intermediates -> compare with bf16-appropriate tolerance
    RTOL, ATOL = 3e-2, 5e-2

    # Config 1: BasicBlock(4, 8, stride=2, option='A') -- LambdaLayer shortcut.
    n, c_in, l, planes, stride = 2, 4, 16, 8, 2
    params = _make_params(k_pa, c_in, planes)
    x = jax.random.normal(k_xa, (n, c_in, l), jnp.float32)
    out = jax.block_until_ready(basic_block_forward(x, params, stride=stride))
    ref = basic_block_ref(x, params, stride=stride)
    assert out.shape == ref.shape == (n, planes, l // stride), out.shape
    assert jnp.allclose(out, ref, rtol=RTOL, atol=ATOL), "mismatch (option-A block)"

    # Config 2: BasicBlock(8, 8, stride=1) -- identity shortcut path.
    n, c_in, l, planes, stride = 2, 8, 16, 8, 1
    params = _make_params(k_pb, c_in, planes)
    x = jax.random.normal(k_xb, (n, c_in, l), jnp.float32)
    out = jax.block_until_ready(basic_block_forward(x, params, stride=stride))
    ref = basic_block_ref(x, params, stride=stride)
    assert out.shape == ref.shape == (n, planes, l), out.shape
    assert jnp.allclose(out, ref, rtol=RTOL, atol=ATOL), "mismatch (identity block)"

    print("KERNEL_OK")
</pallas_src>

<mosaic_0001>
module attributes {stable_mosaic.version = 11 : i64} {
  func.func @_conv1_kernel(%arg0: i32, %arg1: i32, %arg2: memref<2x4x128xbf16, #tpu.memory_space<vmem>>, %arg3: memref<3x8x4xbf16, #tpu.memory_space<vmem>>, %arg4: memref<1x128xf32, #tpu.memory_space<vmem>>, %arg5: memref<8x128xbf16, #tpu.memory_space<vmem>>, %arg6: memref<1x8x2xf32, #tpu.memory_space<vmem>>) attributes {dimension_semantics = [#tpu.dimension_semantics<parallel>, #tpu.dimension_semantics<arbitrary>], iteration_bounds = array<i64: 1, 1>, scalar_prefetch = 0 : i64, scratch_operands = 0 : i64, tpu.core_type = #tpu.core_type<tc>, window_params = [{transform_indices = @transform_0, window_bounds = array<i64: 2, 4, 128>}, {pipeline_mode = #tpu.pipeline_mode<synchronous>, transform_indices = @transform_1, window_bounds = array<i64: 3, 8, 4>}, {pipeline_mode = #tpu.pipeline_mode<synchronous>, transform_indices = @transform_2, window_bounds = array<i64: 1, 128>}, {transform_indices = @transform_3, window_bounds = array<i64: 8, 128>}, {transform_indices = @transform_4, window_bounds = array<i64: 1, 8, 2>}]} {
    %c0 = arith.constant 0 : index
    %c0_0 = arith.constant 0 : index
    %0 = vector.load %arg4[%c0, %c0_0] : memref<1x128xf32, #tpu.memory_space<vmem>>, vector<1x128xf32>
    %c0_1 = arith.constant 0 : index
    %c0_2 = arith.constant 0 : index
    %c0_3 = arith.constant 0 : index
    %1 = vector.load %arg2[%c0_1, %c0_2, %c0_3] : memref<2x4x128xbf16, #tpu.memory_space<vmem>>, vector<1x4x128xbf16>
    %2 = vector.shape_cast %1 : vector<1x4x128xbf16> to vector<4x128xbf16>
    %c1 = arith.constant 1 : index
    %c0_4 = arith.constant 0 : index
    %c0_5 = arith.constant 0 : index
    %3 = vector.load %arg2[%c1, %c0_4, %c0_5] : memref<2x4x128xbf16, #tpu.memory_space<vmem>>, vector<1x4x128xbf16>
    %4 = vector.shape_cast %3 : vector<1x4x128xbf16> to vector<4x128xbf16>
    %5 = arith.extf %4 : vector<4x128xbf16> to vector<4x128xf32>
    %c1_6 = arith.constant 1 : index
    %c0_7 = arith.constant 0 : index
    %c0_8 = arith.constant 0 : index
    %6 = vector.load %arg3[%c1_6, %c0_7, %c0_8] : memref<3x8x4xbf16, #tpu.memory_space<vmem>>, vector<1x8x4xbf16>
    %7 = vector.shape_cast %6 : vector<1x8x4xbf16> to vector<8x4xbf16>
    %cst = arith.constant dense<0.000000e+00> : vector<8x128xf32>
    %8 = tpu.matmul %7, %2, %cst {dimension_numbers = #tpu.dot_dimension_numbers<[1], [0], [0], [1], [0, 0, 1, 1], [], []>} : vector<8x4xbf16>, vector<4x128xbf16>, vector<8x128xf32> -> vector<8x128xf32>
    %c2 = arith.constant 2 : index
    %c0_9 = arith.constant 0 : index
    %c0_10 = arith.constant 0 : index
    %9 = vector.load %arg3[%c2, %c0_9, %c0_10] : memref<3x8x4xbf16, #tpu.memory_space<vmem>>, vector<1x8x4xbf16>
    %10 = vector.shape_cast %9 : vector<1x8x4xbf16> to vector<8x4xbf16>
    %cst_11 = arith.constant dense<0.000000e+00> : vector<8x128xf32>
    %11 = tpu.matmul %10, %4, %cst_11 {dimension_numbers = #tpu.dot_dimension_numbers<[1], [0], [0], [1], [0, 0, 1, 1], [], []>} : vector<8x4xbf16>, vector<4x128xbf16>, vector<8x128xf32> -> vector<8x128xf32>
    %12 = arith.addf %8, %11 : vector<8x128xf32>
    %c0_12 = arith.constant 0 : index
    %c0_13 = arith.constant 0 : index
    %c0_14 = arith.constant 0 : index
    %13 = vector.load %arg3[%c0_12, %c0_13, %c0_14] : memref<3x8x4xbf16, #tpu.memory_space<vmem>>, vector<1x8x4xbf16>
    %14 = vector.shape_cast %13 : vector<1x8x4xbf16> to vector<8x4xbf16>
    %15 = vector.extract_strided_slice %5 {offsets = [0, 127], sizes = [4, 1], strides = [1, 1]} : vector<4x128xf32> to vector<4x1xf32>
    %16 = vector.extract_strided_slice %5 {offsets = [0, 0], sizes = [4, 127], strides = [1, 1]} : vector<4x128xf32> to vector<4x127xf32>
    %17 = tpu.concatenate %15, %16 in 1 : vector<4x1xf32>, vector<4x127xf32> -> vector<4x128xf32>
    %18 = arith.truncf %17 : vector<4x128xf32> to vector<4x128xbf16>
    %cst_15 = arith.constant dense<0.000000e+00> : vector<8x128xf32>
    %19 = tpu.matmul %14, %18, %cst_15 {dimension_numbers = #tpu.dot_dimension_numbers<[1], [0], [0], [1], [0, 0, 1, 1], [], []>} : vector<8x4xbf16>, vector<4x128xbf16>, vector<8x128xf32> -> vector<8x128xf32>
    %20 = arith.addf %12, %19 : vector<8x128xf32>
    %21 = vector.broadcast %0 : vector<1x128xf32> to vector<8x128xf32>
    %22 = arith.mulf %20, %21 : vector<8x128xf32>
    %23 = arith.truncf %22 : vector<8x128xf32> to vector<8x128xbf16>
    %c0_16 = arith.constant 0 : index
    %c0_17 = arith.constant 0 : index
    %24 = vector.load %arg5[%c0_16, %c0_17] : memref<8x128xbf16, #tpu.memory_space<vmem>>, vector<8x128xbf16>
    tpu.vector_store %arg5[%c0_16, %c0_17], %23 {strides = array<i32>} : memref<8x128xbf16, #tpu.memory_space<vmem>>, vector<8x128xbf16>,
    %c0_i32 = arith.constant 0 : i32
    %25 = arith.cmpi eq, %arg1, %c0_i32 : i32
    %26 = arith.extui %25 : i1 to i32
    %c0_i32_18 = arith.constant 0 : i32
    %27 = arith.cmpi ne, %26, %c0_i32_18 : i32
    scf.if %27 {
      %cst_27 = arith.constant 0.000000e+00 : f32
      %40 = vector.broadcast %cst_27 : f32 to vector<1x8x2xf32>
      %c0_28 = arith.constant 0 : index
      %c0_29 = arith.constant 0 : index
      %c0_30 = arith.constant 0 : index
      %41 = vector.load %arg6[%c0_28, %c0_29, %c0_30] : memref<1x8x2xf32, #tpu.memory_space<vmem>>, vector<1x8x2xf32>
      tpu.vector_store %arg6[%c0_28, %c0_29, %c0_30], %40 {strides = array<i32>} : memref<1x8x2xf32, #tpu.memory_space<vmem>>, vector<1x8x2xf32>,
    } else {
    }
    %c0_19 = arith.constant 0 : index
    %c0_20 = arith.constant 0 : index
    %c0_21 = arith.constant 0 : index
    %28 = vector.load %arg6[%c0_19, %c0_20, %c0_21] : memref<1x8x2xf32, #tpu.memory_space<vmem>>, vector<1x8x2xf32>
    %29 = vector.shape_cast %28 : vector<1x8x2xf32> to vector<8x2xf32>
    %cst_22 = arith.constant dense<0.000000e+00> : vector<8xf32>
    %30 = vector.multi_reduction <add>, %22, %cst_22 [1] : vector<8x128xf32> to vector<8xf32>
    %31 = vector.shape_cast %30 : vector<8xf32> to vector<8x1xf32>
    %32 = arith.mulf %22, %22 : vector<8x128xf32>
    %cst_23 = arith.constant dense<0.000000e+00> : vector<8xf32>
    %33 = vector.multi_reduction <add>, %32, %cst_23 [1] : vector<8x128xf32> to vector<8xf32>
    %34 = vector.shape_cast %33 : vector<8xf32> to vector<8x1xf32>
    %35 = tpu.concatenate %31, %34 in 1 : vector<8x1xf32>, vector<8x1xf32> -> vector<8x2xf32>
    %36 = arith.addf %29, %35 : vector<8x2xf32>
    %c0_24 = arith.constant 0 : index
    %c0_25 = arith.constant 0 : index
    %c0_26 = arith.constant 0 : index
    %37 = vector.load %arg6[%c0_24, %c0_25, %c0_26] : memref<1x8x2xf32, #tpu.memory_space<vmem>>, vector<1x8x2xf32>
    %38 = vector.shape_cast %37 : vector<1x8x2xf32> to vector<8x2xf32>
    %39 = vector.shape_cast %36 : vector<8x2xf32> to vector<1x8x2xf32>
    tpu.vector_store %arg6[%c0_24, %c0_25, %c0_26], %39 {strides = array<i32>} : memref<1x8x2xf32, #tpu.memory_space<vmem>>, vector<1x8x2xf32>,
    return
  }
  func.func @transform_0(%arg0: i32, %arg1: i32) -> (i32, i32, i32) {
    %c1_i32 = arith.constant 1 : i32
    %0 = arith.muli %arg0, %c1_i32 : i32
    %1 = arith.addi %0, %arg1 : i32
    %c0_i32 = arith.constant 0 : i32
    %c0_i32_0 = arith.constant 0 : i32
    %c0_i32_1 = arith.constant 0 : i32
    return %c0_i32, %c0_i32_0, %1 : i32, i32, i32
  }
  func.func @transform_1(%arg0: i32, %arg1: i32) -> (i32, i32, i32) {
    %c0_i32 = arith.constant 0 : i32
    %c0_i32_0 = arith.constant 0 : i32
    %c0_i32_1 = arith.constant 0 : i32
    %c0_i32_2 = arith.constant 0 : i32
    return %c0_i32, %c0_i32_0, %c0_i32_1 : i32, i32, i32
  }
  func.func @transform_2(%arg0: i32, %arg1: i32) -> (i32, i32) {
    %c0_i32 = arith.constant 0 : i32
    %c0_i32_0 = arith.constant 0 : i32
    %c0_i32_1 = arith.constant 0 : i32
    return %c0_i32, %c0_i32_0 : i32, i32
  }
  func.func @transform_3(%arg0: i32, %arg1: i32) -> (i32, i32) {
    %c1_i32 = arith.constant 1 : i32
    %0 = arith.muli %arg0, %c1_i32 : i32
    %1 = arith.addi %0, %arg1 : i32
    %c0_i32 = arith.constant 0 : i32
    %c0_i32_0 = arith.constant 0 : i32
    return %c0_i32, %1 : i32, i32
  }
  func.func @transform_4(%arg0: i32, %arg1: i32) -> (i32, i32, i32) {
    %c0_i32 = arith.constant 0 : i32
    %c0_i32_0 = arith.constant 0 : i32
    %c0_i32_1 = arith.constant 0 : i32
    return %arg0, %c0_i32, %c0_i32_0 : i32, i32, i32
  }
}

module attributes {stable_mosaic.version = 11 : i64} {
  func.func @_conv2_kernel(%arg0: i32, %arg1: i32, %arg2: memref<8x128xbf16, #tpu.memory_space<vmem>>, %arg3: memref<3x8x8xbf16, #tpu.memory_space<vmem>>, %arg4: memref<1x128xf32, #tpu.memory_space<vmem>>, %arg5: memref<8x1xf32, #tpu.memory_space<vmem>>, %arg6: memref<8x1xf32, #tpu.memory_space<vmem>>, %arg7: memref<8x128xbf16, #tpu.memory_space<vmem>>, %arg8: memref<1x8x2xf32, #tpu.memory_space<vmem>>) attributes {dimension_semantics = [#tpu.dimension_semantics<parallel>, #tpu.dimension_semantics<arbitrary>], iteration_bounds = array<i64: 1, 1>, scalar_prefetch = 0 : i64, scratch_operands = 0 : i64, tpu.core_type = #tpu.core_type<tc>, window_params = [{transform_indices = @transform_0, window_bounds = array<i64: 8, 128>}, {pipeline_mode = #tpu.pipeline_mode<synchronous>, transform_indices = @transform_1, window_bounds = array<i64: 3, 8, 8>}, {pipeline_mode = #tpu.pipeline_mode<synchronous>, transform_indices = @transform_2, window_bounds = array<i64: 1, 128>}, {pipeline_mode = #tpu.pipeline_mode<synchronous>, transform_indices = @transform_3, window_bounds = array<i64: 8, 1>}, {pipeline_mode = #tpu.pipeline_mode<synchronous>, transform_indices = @transform_4, window_bounds = array<i64: 8, 1>}, {transform_indices = @transform_5, window_bounds = array<i64: 8, 128>}, {transform_indices = @transform_6, window_bounds = array<i64: 1, 8, 2>}]} {
    %c0 = arith.constant 0 : index
    %c0_0 = arith.constant 0 : index
    %0 = vector.load %arg4[%c0, %c0_0] : memref<1x128xf32, #tpu.memory_space<vmem>>, vector<1x128xf32>
    %c0_1 = arith.constant 0 : index
    %c0_2 = arith.constant 0 : index
    %1 = vector.load %arg2[%c0_1, %c0_2] : memref<8x128xbf16, #tpu.memory_space<vmem>>, vector<8x128xbf16>
    %2 = arith.extf %1 : vector<8x128xbf16> to vector<8x128xf32>
    %c0_3 = arith.constant 0 : index
    %c0_4 = arith.constant 0 : index
    %3 = vector.load %arg5[%c0_3, %c0_4] : memref<8x1xf32, #tpu.memory_space<vmem>>, vector<8x1xf32>
    %4 = vector.broadcast %3 : vector<8x1xf32> to vector<8x128xf32>
    %5 = arith.mulf %2, %4 : vector<8x128xf32>
    %c0_5 = arith.constant 0 : index
    %c0_6 = arith.constant 0 : index
    %6 = vector.load %arg6[%c0_5, %c0_6] : memref<8x1xf32, #tpu.memory_space<vmem>>, vector<8x1xf32>
    %7 = vector.broadcast %6 : vector<8x1xf32> to vector<8x128xf32>
    %8 = arith.addf %5, %7 : vector<8x128xf32>
    %cst = arith.constant 0.000000e+00 : f32
    %9 = vector.broadcast %cst : f32 to vector<8x128xf32>
    %10 = arith.maximumf %8, %9 : vector<8x128xf32>
    %11 = vector.broadcast %0 : vector<1x128xf32> to vector<8x128xf32>
    %12 = arith.mulf %10, %11 : vector<8x128xf32>
    %c1 = arith.constant 1 : index
    %c0_7 = arith.constant 0 : index
    %c0_8 = arith.constant 0 : index
    %13 = vector.load %arg3[%c1, %c0_7, %c0_8] : memref<3x8x8xbf16, #tpu.memory_space<vmem>>, vector<1x8x8xbf16>
    %14 = vector.shape_cast %13 : vector<1x8x8xbf16> to vector<8x8xbf16>
    %15 = arith.truncf %12 : vector<8x128xf32> to vector<8x128xbf16>
    %cst_9 = arith.constant dense<0.000000e+00> : vector<8x128xf32>
    %16 = tpu.matmul %14, %15, %cst_9 {dimension_numbers = #tpu.dot_dimension_numbers<[1], [0], [0], [1], [0, 0, 1, 1], [], []>} : vector<8x8xbf16>, vector<8x128xbf16>, vector<8x128xf32> -> vector<8x128xf32>
    %c0_10 = arith.constant 0 : index
    %c0_11 = arith.constant 0 : index
    %c0_12 = arith.constant 0 : index
    %17 = vector.load %arg3[%c0_10, %c0_11, %c0_12] : memref<3x8x8xbf16, #tpu.memory_space<vmem>>, vector<1x8x8xbf16>
    %18 = vector.shape_cast %17 : vector<1x8x8xbf16> to vector<8x8xbf16>
    %19 = vector.extract_strided_slice %12 {offsets = [0, 127], sizes = [8, 1], strides = [1, 1]} : vector<8x128xf32> to vector<8x1xf32>
    %20 = vector.extract_strided_slice %12 {offsets = [0, 0], sizes = [8, 127], strides = [1, 1]} : vector<8x128xf32> to vector<8x127xf32>
    %21 = tpu.concatenate %19, %20 in 1 : vector<8x1xf32>, vector<8x127xf32> -> vector<8x128xf32>
    %22 = arith.truncf %21 : vector<8x128xf32> to vector<8x128xbf16>
    %cst_13 = arith.constant dense<0.000000e+00> : vector<8x128xf32>
    %23 = tpu.matmul %18, %22, %cst_13 {dimension_numbers = #tpu.dot_dimension_numbers<[1], [0], [0], [1], [0, 0, 1, 1], [], []>} : vector<8x8xbf16>, vector<8x128xbf16>, vector<8x128xf32> -> vector<8x128xf32>
    %24 = arith.addf %16, %23 : vector<8x128xf32>
    %c2 = arith.constant 2 : index
    %c0_14 = arith.constant 0 : index
    %c0_15 = arith.constant 0 : index
    %25 = vector.load %arg3[%c2, %c0_14, %c0_15] : memref<3x8x8xbf16, #tpu.memory_space<vmem>>, vector<1x8x8xbf16>
    %26 = vector.shape_cast %25 : vector<1x8x8xbf16> to vector<8x8xbf16>
    %27 = vector.extract_strided_slice %12 {offsets = [0, 1], sizes = [8, 127], strides = [1, 1]} : vector<8x128xf32> to vector<8x127xf32>
    %28 = vector.extract_strided_slice %12 {offsets = [0, 0], sizes = [8, 1], strides = [1, 1]} : vector<8x128xf32> to vector<8x1xf32>
    %29 = tpu.concatenate %27, %28 in 1 : vector<8x127xf32>, vector<8x1xf32> -> vector<8x128xf32>
    %30 = arith.truncf %29 : vector<8x128xf32> to vector<8x128xbf16>
    %cst_16 = arith.constant dense<0.000000e+00> : vector<8x128xf32>
    %31 = tpu.matmul %26, %30, %cst_16 {dimension_numbers = #tpu.dot_dimension_numbers<[1], [0], [0], [1], [0, 0, 1, 1], [], []>} : vector<8x8xbf16>, vector<8x128xbf16>, vector<8x128xf32> -> vector<8x128xf32>
    %32 = arith.addf %24, %31 : vector<8x128xf32>
    %33 = vector.broadcast %0 : vector<1x128xf32> to vector<8x128xf32>
    %34 = arith.mulf %32, %33 : vector<8x128xf32>
    %35 = arith.truncf %34 : vector<8x128xf32> to vector<8x128xbf16>
    %c0_17 = arith.constant 0 : index
    %c0_18 = arith.constant 0 : index
    %36 = vector.load %arg7[%c0_17, %c0_18] : memref<8x128xbf16, #tpu.memory_space<vmem>>, vector<8x128xbf16>
    tpu.vector_store %arg7[%c0_17, %c0_18], %35 {strides = array<i32>} : memref<8x128xbf16, #tpu.memory_space<vmem>>, vector<8x128xbf16>,
    %c0_i32 = arith.constant 0 : i32
    %37 = arith.cmpi eq, %arg1, %c0_i32 : i32
    %38 = arith.extui %37 : i1 to i32
    %c0_i32_19 = arith.constant 0 : i32
    %39 = arith.cmpi ne, %38, %c0_i32_19 : i32
    scf.if %39 {
      %cst_28 = arith.constant 0.000000e+00 : f32
      %52 = vector.broadcast %cst_28 : f32 to vector<1x8x2xf32>
      %c0_29 = arith.constant 0 : index
      %c0_30 = arith.constant 0 : index
      %c0_31 = arith.constant 0 : index
      %53 = vector.load %arg8[%c0_29, %c0_30, %c0_31] : memref<1x8x2xf32, #tpu.memory_space<vmem>>, vector<1x8x2xf32>
      tpu.vector_store %arg8[%c0_29, %c0_30, %c0_31], %52 {strides = array<i32>} : memref<1x8x2xf32, #tpu.memory_space<vmem>>, vector<1x8x2xf32>,
    } else {
    }
    %c0_20 = arith.constant 0 : index
    %c0_21 = arith.constant 0 : index
    %c0_22 = arith.constant 0 : index
    %40 = vector.load %arg8[%c0_20, %c0_21, %c0_22] : memref<1x8x2xf32, #tpu.memory_space<vmem>>, vector<1x8x2xf32>
    %41 = vector.shape_cast %40 : vector<1x8x2xf32> to vector<8x2xf32>
    %cst_23 = arith.constant dense<0.000000e+00> : vector<8xf32>
    %42 = vector.multi_reduction <add>, %34, %cst_23 [1] : vector<8x128xf32> to vector<8xf32>
    %43 = vector.shape_cast %42 : vector<8xf32> to vector<8x1xf32>
    %44 = arith.mulf %34, %34 : vector<8x128xf32>
    %cst_24 = arith.constant dense<0.000000e+00> : vector<8xf32>
    %45 = vector.multi_reduction <add>, %44, %cst_24 [1] : vector<8x128xf32> to vector<8xf32>
    %46 = vector.shape_cast %45 : vector<8xf32> to vector<8x1xf32>
    %47 = tpu.concatenate %43, %46 in 1 : vector<8x1xf32>, vector<8x1xf32> -> vector<8x2xf32>
    %48 = arith.addf %41, %47 : vector<8x2xf32>
    %c0_25 = arith.constant 0 : index
    %c0_26 = arith.constant 0 : index
    %c0_27 = arith.constant 0 : index
    %49 = vector.load %arg8[%c0_25, %c0_26, %c0_27] : memref<1x8x2xf32, #tpu.memory_space<vmem>>, vector<1x8x2xf32>
    %50 = vector.shape_cast %49 : vector<1x8x2xf32> to vector<8x2xf32>
    %51 = vector.shape_cast %48 : vector<8x2xf32> to vector<1x8x2xf32>
    tpu.vector_store %arg8[%c0_25, %c0_26, %c0_27], %51 {strides = array<i32>} : memref<1x8x2xf32, #tpu.memory_space<vmem>>, vector<1x8x2xf32>,
    return
  }
  func.func @transform_0(%arg0: i32, %arg1: i32) -> (i32, i32) {
    %c1_i32 = arith.constant 1 : i32
    %0 = arith.muli %arg0, %c1_i32 : i32
    %1 = arith.addi %0, %arg1 : i32
    %c0_i32 = arith.constant 0 : i32
    %c0_i32_0 = arith.constant 0 : i32
    return %c0_i32, %1 : i32, i32
  }
  func.func @transform_1(%arg0: i32, %arg1: i32) -> (i32, i32, i32) {
    %c0_i32 = arith.constant 0 : i32
    %c0_i32_0 = arith.constant 0 : i32
    %c0_i32_1 = arith.constant 0 : i32
    %c0_i32_2 = arith.constant 0 : i32
    return %c0_i32, %c0_i32_0, %c0_i32_1 : i32, i32, i32
  }
  func.func @transform_2(%arg0: i32, %arg1: i32) -> (i32, i32) {
    %c0_i32 = arith.constant 0 : i32
    %c0_i32_0 = arith.constant 0 : i32
    %c0_i32_1 = arith.constant 0 : i32
    return %c0_i32, %c0_i32_0 : i32, i32
  }
  func.func @transform_3(%arg0: i32, %arg1: i32) -> (i32, i32) {
    %c0_i32 = arith.constant 0 : i32
    %c0_i32_0 = arith.constant 0 : i32
    %c0_i32_1 = arith.constant 0 : i32
    return %c0_i32, %c0_i32_0 : i32, i32
  }
  func.func @transform_4(%arg0: i32, %arg1: i32) -> (i32, i32) {
    %c0_i32 = arith.constant 0 : i32
    %c0_i32_0 = arith.constant 0 : i32
    %c0_i32_1 = arith.constant 0 : i32
    return %c0_i32, %c0_i32_0 : i32, i32
  }
  func.func @transform_5(%arg0: i32, %arg1: i32) -> (i32, i32) {
    %c1_i32 = arith.constant 1 : i32
    %0 = arith.muli %arg0, %c1_i32 : i32
    %1 = arith.addi %0, %arg1 : i32
    %c0_i32 = arith.constant 0 : i32
    %c0_i32_0 = arith.constant 0 : i32
    return %c0_i32, %1 : i32, i32
  }
  func.func @transform_6(%arg0: i32, %arg1: i32) -> (i32, i32, i32) {
    %c0_i32 = arith.constant 0 : i32
    %c0_i32_0 = arith.constant 0 : i32
    %c0_i32_1 = arith.constant 0 : i32
    return %arg0, %c0_i32, %c0_i32_0 : i32, i32, i32
  }
}

module attributes {stable_mosaic.version = 11 : i64} {
  func.func @_bn2_res_kernel(%arg0: i32, %arg1: memref<8x128xbf16, #tpu.memory_space<vmem>>, %arg2: memref<8x128xbf16, #tpu.memory_space<vmem>>, %arg3: memref<8x1xf32, #tpu.memory_space<vmem>>, %arg4: memref<8x1xf32, #tpu.memory_space<vmem>>, %arg5: memref<8x128xf32, #tpu.memory_space<vmem>>) attributes {dimension_semantics = [#tpu.dimension_semantics<parallel>], iteration_bounds = array<i64: 1>, scalar_prefetch = 0 : i64, scratch_operands = 0 : i64, tpu.core_type = #tpu.core_type<tc>, window_params = [{transform_indices = @transform_0, window_bounds = array<i64: 8, 128>}, {transform_indices = @transform_1, window_bounds = array<i64: 8, 128>}, {pipeline_mode = #tpu.pipeline_mode<synchronous>, transform_indices = @transform_2, window_bounds = array<i64: 8, 1>}, {pipeline_mode = #tpu.pipeline_mode<synchronous>, transform_indices = @transform_3, window_bounds = array<i64: 8, 1>}, {transform_indices = @transform_4, window_bounds = array<i64: 8, 128>}]} {
    %c0 = arith.constant 0 : index
    %c0_0 = arith.constant 0 : index
    %0 = vector.load %arg1[%c0, %c0_0] : memref<8x128xbf16, #tpu.memory_space<vmem>>, vector<8x128xbf16>
    %1 = arith.extf %0 : vector<8x128xbf16> to vector<8x128xf32>
    %c0_1 = arith.constant 0 : index
    %c0_2 = arith.constant 0 : index
    %2 = vector.load %arg3[%c0_1, %c0_2] : memref<8x1xf32, #tpu.memory_space<vmem>>, vector<8x1xf32>
    %3 = vector.broadcast %2 : vector<8x1xf32> to vector<8x128xf32>
    %4 = arith.mulf %1, %3 : vector<8x128xf32>
    %c0_3 = arith.constant 0 : index
    %c0_4 = arith.constant 0 : index
    %5 = vector.load %arg4[%c0_3, %c0_4] : memref<8x1xf32, #tpu.memory_space<vmem>>, vector<8x1xf32>
    %6 = vector.broadcast %5 : vector<8x1xf32> to vector<8x128xf32>
    %7 = arith.addf %4, %6 : vector<8x128xf32>
    %c0_5 = arith.constant 0 : index
    %c0_6 = arith.constant 0 : index
    %8 = vector.load %arg2[%c0_5, %c0_6] : memref<8x128xbf16, #tpu.memory_space<vmem>>, vector<8x128xbf16>
    %9 = arith.extf %8 : vector<8x128xbf16> to vector<8x128xf32>
    %10 = arith.addf %7, %9 : vector<8x128xf32>
    %cst = arith.constant 0.000000e+00 : f32
    %11 = vector.broadcast %cst : f32 to vector<8x128xf32>
    %12 = arith.maximumf %10, %11 : vector<8x128xf32>
    %c0_7 = arith.constant 0 : index
    %c0_8 = arith.constant 0 : index
    %13 = vector.load %arg5[%c0_7, %c0_8] : memref<8x128xf32, #tpu.memory_space<vmem>>, vector<8x128xf32>
    tpu.vector_store %arg5[%c0_7, %c0_8], %12 {strides = array<i32>} : memref<8x128xf32, #tpu.memory_space<vmem>>, vector<8x128xf32>,
    return
  }
  func.func @transform_0(%arg0: i32) -> (i32, i32) {
    %c0_i32 = arith.constant 0 : i32
    %c0_i32_0 = arith.constant 0 : i32
    return %c0_i32, %arg0 : i32, i32
  }
  func.func @transform_1(%arg0: i32) -> (i32, i32) {
    %c0_i32 = arith.constant 0 : i32
    %c0_i32_0 = arith.constant 0 : i32
    return %c0_i32, %arg0 : i32, i32
  }
  func.func @transform_2(%arg0: i32) -> (i32, i32) {
    %c0_i32 = arith.constant 0 : i32
    %c0_i32_0 = arith.constant 0 : i32
    %c0_i32_1 = arith.constant 0 : i32
    return %c0_i32, %c0_i32_0 : i32, i32
  }
  func.func @transform_3(%arg0: i32) -> (i32, i32) {
    %c0_i32 = arith.constant 0 : i32
    %c0_i32_0 = arith.constant 0 : i32
    %c0_i32_1 = arith.constant 0 : i32
    return %c0_i32, %c0_i32_0 : i32, i32
  }
  func.func @transform_4(%arg0: i32) -> (i32, i32) {
    %c0_i32 = arith.constant 0 : i32
    %c0_i32_0 = arith.constant 0 : i32
    return %c0_i32, %arg0 : i32, i32
  }
}

</mosaic_0001>

<llo_original>
// kernel: tile.8
$region0: #{tile.8}
  #allocation0 [shape = 's32[1]{0}', space=sflag, size = 0x4, scoped, tag = 'scoped memory for tile.8']
  %s0 = inlined_call_operand.vmem [shape: f32[64], index: 0, kind: input, shape index: {}]
  %s1 = inlined_call_operand.vmem [shape: f32[2,64], index: 1, kind: output, shape index: {}]
  // Predicated region
  $region2: #{tile.8} parent=0 // pred_check
    _
  $region3: #{tile.8} parent=0 // pred_check_branch
    %3 = sbr.rel (0) target = $region5
  $region4: #{tile.8} parent=0 // pred_region
    _
  $region5: #{tile.8} parent=0 // pred_fallthru
    _
  %v4 = vld [vmem:[%s0] ss:$0 sm:$0xff]
  %5 = vst [vmem:[%s1] sm:$0x3] %v4

// kernel: tile.9
$region0: #{tile.9}
  %s0 = inlined_call_operand.vmem [shape: f32[2,64], index: 0, kind: input, shape index: {}]
  %s1 = inlined_call_operand.hbm [shape: f32[1,128], index: 1, kind: output, shape index: {}]
  $region1: #{tile.9} parent=0
    #allocation0 [shape = 'u8[512]{0}', space=vmem, size = 0x400, scoped, tag = 'operand span for operand 1']
    #allocation1 [shape = 's32[1]{0}', space=sflag, size = 0x4, scoped, tag = 'scoped memory for tile.9']
    #allocation2 [shape = 'u8[4096]{0}', space=vmem, size = 0x1000, scoped, tag = 'scoped mem for output reshape']
    #allocation3 [shape = 'u8[4096]{0}', space=vmem, size = 0x1000, scoped, tag = 'scoped mem for input reshape']
    %2 = vsyncpa [#allocation1], 0
    %s4 = sshllo.u32 0, 2
    %v5 = vld [vmem:[%s0] sm:%s4]
    %6 = vst [vmem:[#allocation3] sm:%s4] %v5
    %v7 = vld [vmem:[#allocation3] sm:$0x1]
    %vm8 = vcmask 523264
    %9 = vst.msk [vmem:[#allocation2] sm:$0x1] %vm8, %v7
    %s10 = scalar_lea.vmem [#allocation3], 1
    %v11 = vld [vmem:[%s10] sm:$0x1]
    %12 = vrot.lane.b32.xlu0 %v11, 64
    %v13 = vpop.permute.xlu0 %12
    %vm14 = vcmask 1048064
    %15 = vst.msk [vmem:[#allocation2] sm:$0x1] %vm14, %v13
    %s17 = sshllo.u32 0, 1
    %v19 = vld [vmem:[#allocation2] sm:%s17]
    %s20 = sshllo.u32 0, 1
    %21 = vst [vmem:[#allocation0] sm:%s20] %v19
    %s23 = ssub.s32 16, 16
    %24 = vsyncadd [#allocation1], %s23
    %s26 = sshll.u32 [#allocation0], 4
    %s27 = int_to_ptr.vmem [resolvable:$true] %s26
    %29 = dma.vmem_to_hbm [thread:$0]  %s27, 16, %s1, [#allocation1]
    %30 = dma.done [#allocation1], 16
    %31 = vsyncpa [#allocation1], 1

// kernel: basic_block_forward.5
$region0: #{basic_block_forward.5}
  #allocation0 [shape = 'u32[]', space=smem, size = 0x4, offset = 0x4, fixed_abs, tag = 'smem constant byte address 0x4 - core index']
  #allocation1 [shape = 'u32[144,128]{1,0:T(1,128)}', space=vmem, size = 0x12000, scoped, tag = 'internal scratch']
  %s0 = inlined_call_operand.hbm [shape: bf16[8,128], index: 0, kind: input, shape index: {}]
  %s1 = inlined_call_operand.hbm [shape: bf16[8,128], index: 1, kind: input, shape index: {}]
  %s2 = inlined_call_operand.hbm [shape: f32[8,1], index: 2, kind: input, shape index: {}]
  %s3 = inlined_call_operand.hbm [shape: f32[8,1], index: 3, kind: input, shape index: {}]
  %s4 = inlined_call_operand.hbm [shape: f32[8,128], index: 4, kind: output, shape index: {}]
  %s5 = sld [smem:[#allocation0]]
  $region42: #{basic_block_forward.5} parent=0
    _
  %s7 = ssub.s32 1, %s5
  %s8 = scalar_select 0, %s7, %s5
  $region1: #{basic_block_forward.5} parent=0
    #allocation2 [shape = 'u8[2048]{0}', space=vmem, size = 0x800, scoped, tag = 'input window, operand 0, single buffered']
    #allocation3 [shape = 's32[1]{0}', space=sflag, size = 0x4, scoped, tag = 'scoped memory for basic_block_forward.5']
    #allocation4 [shape = 's32[1]{0}', space=sflag, size = 0x4, scoped, tag = 'scoped memory for basic_block_forward.5']
    #allocation5 [shape = 'u8[2048]{0}', space=vmem, size = 0x800, scoped, tag = 'input window, operand 1, single buffered']
    #allocation6 [shape = 's32[1]{0}', space=sflag, size = 0x4, scoped, tag = 'scoped memory for basic_block_forward.5']
    #allocation7 [shape = 'u8[4096]{0}', space=vmem, size = 0x1000, scoped, tag = 'input window, operand 2, single buffered']
    #allocation8 [shape = 'u8[4096]{0}', space=vmem, size = 0x1000, scoped, tag = 'input window, operand 3, single buffered']
    #allocation9 [shape = 's32[1]{0}', space=sflag, size = 0x4, scoped, tag = 'scoped memory for basic_block_forward.5']
    #allocation10 [shape = 'u8[4096]{0}', space=vmem, size = 0x1000, scoped, tag = 'output window, operand 0, single buffered']
    %9 = vsyncpa [#allocation3], 0
    %10 = vsyncpa [#allocation6], 0
    %11 = vsyncpa [#allocation9], 0
    %12 = vsyncpa [#allocation4], 0
    // Predicated region
    $region2: #{basic_block_forward.5} parent=1 // pred_check
      _
    $region3: #{basic_block_forward.5} parent=1 // pred_check_branch
      %14 = sbr.rel (0) target = $region5
    $region4: #{basic_block_forward.5} parent=1 // pred_region
      %s16 = ssub.s32 64, 64
      %17 = vsyncadd [#allocation3], %s16
      %s19 = sshll.u32 [#allocation2], 4
      %s20 = int_to_ptr.vmem [resolvable:$true] %s19
      %22 = dma.hbm_to_vmem [thread:$0]  %s0, 64, %s20, [#allocation3]
    $region5: #{basic_block_forward.5} parent=1 // pred_fallthru
      _
    // Predicated region
    $region6: #{basic_block_forward.5} parent=1 // pred_check
      _
    $region7: #{basic_block_forward.5} parent=1 // pred_check_branch
      %24 = sbr.rel (0) target = $region9
    $region8: #{basic_block_forward.5} parent=1 // pred_region
      %s26 = ssub.s32 64, 64
      %27 = vsyncadd [#allocation6], %s26
      %s29 = sshll.u32 [#allocation5], 4
      %s30 = int_to_ptr.vmem [resolvable:$true] %s29
      %32 = dma.hbm_to_vmem [thread:$0]  %s1, 64, %s30, [#allocation6]
    $region9: #{basic_block_forward.5} parent=1 // pred_fallthru
      _
    // Predicated region
    $region10: #{basic_block_forward.5} parent=1 // pred_check
      _
    $region11: #{basic_block_forward.5} parent=1 // pred_check_branch
      %34 = sbr.rel (0) target = $region13
    $region12: #{basic_block_forward.5} parent=1 // pred_region
      %s36 = ssub.s32 128, 128
      %37 = vsyncadd [#allocation6], %s36
      %s39 = sshll.u32 [#allocation7], 4
      %s40 = int_to_ptr.vmem [resolvable:$true] %s39
      %42 = dma.hbm_to_vmem [thread:$0]  %s2, 128, %s40, [#allocation6]
    $region13: #{basic_block_forward.5} parent=1 // pred_fallthru
      _
    // Predicated region
    $region14: #{basic_block_forward.5} parent=1 // pred_check
      _
    $region15: #{basic_block_forward.5} parent=1 // pred_check_branch
      %44 = sbr.rel (0) target = $region17
    $region16: #{basic_block_forward.5} parent=1 // pred_region
      %s46 = ssub.s32 128, 128
      %47 = vsyncadd [#allocation9], %s46
      %s49 = sshll.u32 [#allocation8], 4
      %s50 = int_to_ptr.vmem [resolvable:$true] %s49
      %52 = dma.hbm_to_vmem [thread:$0]  %s3, 128, %s50, [#allocation9]
    $region17: #{basic_block_forward.5} parent=1 // pred_fallthru
      _
    // Predicated region
    $region18: #{basic_block_forward.5} parent=1 // pred_check
      _
    $region19: #{basic_block_forward.5} parent=1 // pred_check_branch
      %54 = sbr.rel (0) target = $region21
    $region20: #{basic_block_forward.5} parent=1 // pred_region
      %55 = dma.done [#allocation3], 64
    $region21: #{basic_block_forward.5} parent=1 // pred_fallthru
      _
    // Predicated region
    $region22: #{basic_block_forward.5} parent=1 // pred_check
      _
    $region23: #{basic_block_forward.5} parent=1 // pred_check_branch
      %57 = sbr.rel (0) target = $region25
    $region24: #{basic_block_forward.5} parent=1 // pred_region
      %58 = dma.done [#allocation6], 64
    $region25: #{basic_block_forward.5} parent=1 // pred_fallthru
      _
    // Predicated region
    $region26: #{basic_block_forward.5} parent=1 // pred_check
      _
    $region27: #{basic_block_forward.5} parent=1 // pred_check_branch
      %60 = sbr.rel (0) target = $region29
    $region28: #{basic_block_forward.5} parent=1 // pred_region
      %61 = dma.done [#allocation6], 128
    $region29: #{basic_block_forward.5} parent=1 // pred_fallthru
      _
    // Predicated region
    $region30: #{basic_block_forward.5} parent=1 // pred_check
      _
    $region31: #{basic_block_forward.5} parent=1 // pred_check_branch
      %63 = sbr.rel (0) target = $region33
    $region32: #{basic_block_forward.5} parent=1 // pred_region
      %64 = dma.done [#allocation9], 128
    $region33: #{basic_block_forward.5} parent=1 // pred_fallthru
      _
    %v65 = vld [vmem:[#allocation2] sm:$0xf]
    %v66 = vunpack.c.l.bf16 %v65
    %v67 = vld [vmem:[#allocation7] sm:$0xff]
    %69 = vset.pattern.permute.xlu0 0
    %70 = vperm.xlu0 %69, %v67
    %v71 = vpop.permute.xlu0 %70
    %v73 = vmul.f32 %v66, %v71
    %v74 = vld [vmem:[#allocation8] sm:$0xff]
    %76 = vset.pattern.permute.xlu0 0
    %77 = vperm.xlu0 %76, %v74
    %v78 = vpop.permute.xlu0 %77
    %v80 = vadd.f32 %v73, %v78
    %v81 = vld [vmem:[#allocation5] sm:$0xf]
    %v82 = vunpack.c.l.bf16 %v81
    %v83 = vadd.f32 %v80, %v82
    %v84 = vmax.f32 %v83, 0.0
    %85 = vst [vmem:[#allocation10] sm:$0xff] %v84
    // Predicated region
    $region34: #{basic_block_forward.5} parent=1 // pred_check
      _
    $region35: #{basic_block_forward.5} parent=1 // pred_check_branch
      %87 = sbr.rel (0) target = $region37
    $region36: #{basic_block_forward.5} parent=1 // pred_region
      %s89 = ssub.s32 128, 128
      %90 = vsyncadd [#allocation4], %s89
      %s92 = sshll.u32 [#allocation10], 4
      %s93 = int_to_ptr.vmem [resolvable:$true] %s92
      %95 = dma.vmem_to_hbm [thread:$0]  %s93, 128, %s4, [#allocation4]
    $region37: #{basic_block_forward.5} parent=1 // pred_fallthru
      _
    // Predicated region
    $region38: #{basic_block_forward.5} parent=1 // pred_check
      _
    $region39: #{basic_block_forward.5} parent=1 // pred_check_branch
      %97 = sbr.rel (0) target = $region41
    $region40: #{basic_block_forward.5} parent=1 // pred_region
      %98 = dma.done [#allocation4], 128
    $region41: #{basic_block_forward.5} parent=1 // pred_fallthru
      _
    %99 = vsyncpa [#allocation3], 1
    %100 = vsyncpa [#allocation6], 1
    %101 = vsyncpa [#allocation9], 1
    %102 = vsyncpa [#allocation4], 1

// kernel: basic_block_forward.3
$region0: #{basic_block_forward.3}
  #allocation0 [shape = 'u32[]', space=smem, size = 0x4, offset = 0x4, fixed_abs, tag = 'smem constant byte address 0x4 - core index']
  #allocation1 [shape = 'u32[144,128]{1,0:T(1,128)}', space=vmem, size = 0x12000, scoped, tag = 'internal scratch']
  %s0 = inlined_call_operand.hbm [shape: bf16[2,4,128], index: 0, kind: input, shape index: {}]
  %s1 = inlined_call_operand.hbm [shape: bf16[3,8,4], index: 1, kind: input, shape index: {}]
  %s2 = inlined_call_operand.hbm [shape: f32[1,128], index: 2, kind: input, shape index: {}]
  %s3 = inlined_call_operand.hbm [shape: bf16[8,128], index: 3, kind: output, shape index: {0}]
  %s4 = inlined_call_operand.hbm [shape: f32[1,8,2], index: 4, kind: output, shape index: {1}]
  %5 = xla_tuple %s3, %s4
  %s6 = sld [smem:[#allocation0]]
  $region46: #{basic_block_forward.3} parent=0
    _
  %s8 = ssub.s32 1, %s6
  %s9 = scalar_select 0, %s8, %s6
  $region1: #{basic_block_forward.3} parent=0
    #allocation2 [shape = 'u8[2048]{0}', space=vmem, size = 0x800, scoped, tag = 'input window, operand 0, single buffered']
    #allocation3 [shape = 's32[1]{0}', space=sflag, size = 0x4, scoped, tag = 'scoped memory for basic_block_forward.3']
    #allocation4 [shape = 's32[1]{0}', space=sflag, size = 0x4, scoped, tag = 'scoped memory for basic_block_forward.3']
    #allocation5 [shape = 'u8[6144]{0}', space=vmem, size = 0x1800, scoped, tag = 'input window, operand 1, single buffered']
    #allocation6 [shape = 's32[1]{0}', space=sflag, size = 0x4, scoped, tag = 'scoped memory for basic_block_forward.3']
    #allocation7 [shape = 'u8[512]{0}', space=vmem, size = 0x400, scoped, tag = 'input window, operand 2, single buffered']
    #allocation8 [shape = 'u8[2048]{0}', space=vmem, size = 0x800, scoped, tag = 'output window, operand 0, single buffered']
    #allocation9 [shape = 'u8[4096]{0}', space=vmem, size = 0x1000, scoped, tag = 'output window, operand 1, single buffered']
    #allocation10 [shape = 's32[1]{0}', space=sflag, size = 0x4, scoped, tag = 'scoped memory for basic_block_forward.3']
    %10 = vsyncpa [#allocation3], 0
    %11 = vsyncpa [#allocation6], 0
    %12 = vsyncpa [#allocation4], 0
    %13 = vsyncpa [#allocation10], 0
    // Predicated region
    $region2: #{basic_block_forward.3} parent=1 // pred_check
      _
    $region3: #{basic_block_forward.3} parent=1 // pred_check_branch
      %15 = sbr.rel (0) target = $region5
    $region4: #{basic_block_forward.3} parent=1 // pred_region
      %s16 = sadd.s32 0, 0
      %s18 = ssub.s32 64, 64
      %19 = vsyncadd [#allocation3], %s18
      %s20 = smul.addr %s16, 32
      %s21 = scalar_lea.hbm %s0, %s20
      %s22 = sshll.u32 [#allocation2], 4
      %s23 = int_to_ptr.vmem [resolvable:$true] %s22
      %28 = dma.hbm_to_vmem [thread:$0]  %s21, 64, %s23, [#allocation3], 32, 32, 2
    $region5: #{basic_block_forward.3} parent=1 // pred_fallthru
      _
    // Predicated region
    $region6: #{basic_block_forward.3} parent=1 // pred_check
      _
    $region7: #{basic_block_forward.3} parent=1 // pred_check_branch
      %30 = sbr.rel (0) target = $region9
    $region8: #{basic_block_forward.3} parent=1 // pred_region
      %s32 = ssub.s32 192, 192
      %33 = vsyncadd [#allocation6], %s32
      %s34 = sshll.u32 [#allocation5], 4
      %s35 = int_to_ptr.vmem [resolvable:$true] %s34
      %40 = dma.hbm_to_vmem [thread:$0]  %s1, 192, %s35, [#allocation6], 64, 64, 4
    $region9: #{basic_block_forward.3} parent=1 // pred_fallthru
      _
    // Predicated region
    $region10: #{basic_block_forward.3} parent=1 // pred_check
      _
    $region11: #{basic_block_forward.3} parent=1 // pred_check_branch
      %42 = sbr.rel (0) target = $region13
    $region12: #{basic_block_forward.3} parent=1 // pred_region
      %s44 = ssub.s32 16, 16
      %45 = vsyncadd [#allocation6], %s44
      %s47 = sshll.u32 [#allocation7], 4
      %s48 = int_to_ptr.vmem [resolvable:$true] %s47
      %50 = dma.hbm_to_vmem [thread:$0]  %s2, 16, %s48, [#allocation6]
    $region13: #{basic_block_forward.3} parent=1 // pred_fallthru
      _
    // Predicated region
    $region14: #{basic_block_forward.3} parent=1 // pred_check
      _
    $region15: #{basic_block_forward.3} parent=1 // pred_check_branch
      %52 = sbr.rel (0) target = $region17
    $region16: #{basic_block_forward.3} parent=1 // pred_region
      %53 = dma.done [#allocation3], 64
    $region17: #{basic_block_forward.3} parent=1 // pred_fallthru
      _
    // Predicated region
    $region18: #{basic_block_forward.3} parent=1 // pred_check
      _
    $region19: #{basic_block_forward.3} parent=1 // pred_check_branch
      %55 = sbr.rel (0) target = $region21
    $region20: #{basic_block_forward.3} parent=1 // pred_region
      %56 = dma.done [#allocation6], 192
    $region21: #{basic_block_forward.3} parent=1 // pred_fallthru
      _
    // Predicated region
    $region22: #{basic_block_forward.3} parent=1 // pred_check
      _
    $region23: #{basic_block_forward.3} parent=1 // pred_check_branch
      %58 = sbr.rel (0) target = $region25
    $region24: #{basic_block_forward.3} parent=1 // pred_region
      %59 = dma.done [#allocation6], 16
    $region25: #{basic_block_forward.3} parent=1 // pred_fallthru
      _
    %s60 = sadd.s32 0, 0
    %s61 = sadd.s32 0, 0
    %v63 = vld [vmem:[#allocation7] sm:$0x1]
    %v64 = vld [vmem:[#allocation2] sm:$0x3]
    %s65 = scalar_lea.vmem [#allocation2], 2
    %v66 = vld [vmem:[%s65] sm:$0x3]
    %v67 = vunpack.c.l.bf16 %v66
    %s68 = scalar_lea.vmem [#allocation5], 4
    %v69 = vld [vmem:[%s68] sm:$0xf]
    %s70 = scalar_lea.vmem [#allocation5], 8
    %v71 = vld [vmem:[%s70] sm:$0xf]
    %vm72 = vcmask 31744
    %v74 = vsel %vm72, %v71, 0
    %vm76 = vcmask 1041408
    %v78 = vsel %vm76, %v66, 0
    %80 = vmatprep.subr.bf16.mxu0 0
    %81 = vmatpush1.bf16.msra.mxu0 %v78
    %82 = vmatprep.subr.bf16.mxu0 0
    %83 = vmatpush1.bf16.msra.mxu0 0
    %84 = vmatprep.subr.bf16.mxu0 0
    %85 = vmatpush1.bf16.msra.mxu0 0
    %86 = vmatprep.subr.bf16.mxu0 0
    %87 = vmatpush1.bf16.msra.mxu0 0
    %88 = vmatprep.subr.bf16.mxu0 0
    %89 = vmatpush1.bf16.msra.mxu0 0
    %90 = vmatprep.subr.bf16.mxu0 0
    %91 = vmatpush1.bf16.msra.mxu0 0
    %92 = vmatprep.subr.bf16.mxu0 0
    %93 = vmatpush1.bf16.msra.mxu0 0
    %94 = vmatprep.subr.bf16.mxu0 0
    %95 = vmatpush1.bf16.msra.mxu0 0
    %96 = vmatprep.subr.bf16.mxu0 0
    %97 = vmatpush1.bf16.msra.mxu0 0
    %98 = vmatprep.subr.bf16.mxu0 0
    %99 = vmatpush1.bf16.msra.mxu0 0
    %100 = vmatprep.subr.bf16.mxu0 0
    %101 = vmatpush1.bf16.msra.mxu0 0
    %102 = vmatprep.subr.bf16.mxu0 0
    %103 = vmatpush1.bf16.msra.mxu0 0
    %104 = vmatprep.subr.bf16.mxu0 0
    %105 = vmatpush1.bf16.msra.mxu0 0
    %106 = vmatprep.subr.bf16.mxu0 0
    %107 = vmatpush1.bf16.msra.mxu0 0
    %108 = vmatprep.subr.bf16.mxu0 0
    %109 = vmatpush1.bf16.msra.mxu0 0
    %110 = vmatprep.subr.bf16.mxu0 0
    %111 = vmatpush1.bf16.msra.mxu0 0
    %112 = vmatprep.mubr.bf16.mxu0 0
    %113 = vmatmul.mubr.bf16.gmra.mrb[0].mxu0 %v74
    %v114 = vpop.f32.mrb[0].mxu0
    %v115 = vadd.f32 0.0, %v114
    %v116 = vpop.f32.mrb[0].mxu0
    %v117 = vpop.f32.mrb[0].mxu0
    %v118 = vpop.f32.mrb[0].mxu0
    %119 = vdwg.mxu0
    %v121 = vsel %vm72, %v69, 0
    %v124 = vsel %vm76, %v64, 0
    %126 = vmatprep.subr.bf16.mxu0 0
    %127 = vmatpush1.bf16.msra.mxu0 %v124
    %128 = vmatprep.subr.bf16.mxu0 0
    %129 = vmatpush1.bf16.msra.mxu0 0
    %130 = vmatprep.subr.bf16.mxu0 0
    %131 = vmatpush1.bf16.msra.mxu0 0
    %132 = vmatprep.subr.bf16.mxu0 0
    %133 = vmatpush1.bf16.msra.mxu0 0
    %134 = vmatprep.subr.bf16.mxu0 0
    %135 = vmatpush1.bf16.msra.mxu0 0
    %136 = vmatprep.subr.bf16.mxu0 0
    %137 = vmatpush1.bf16.msra.mxu0 0
    %138 = vmatprep.subr.bf16.mxu0 0
    %139 = vmatpush1.bf16.msra.mxu0 0
    %140 = vmatprep.subr.bf16.mxu0 0
    %141 = vmatpush1.bf16.msra.mxu0 0
    %142 = vmatprep.subr.bf16.mxu0 0
    %143 = vmatpush1.bf16.msra.mxu0 0
    %144 = vmatprep.subr.bf16.mxu0 0
    %145 = vmatpush1.bf16.msra.mxu0 0
    %146 = vmatprep.subr.bf16.mxu0 0
    %147 = vmatpush1.bf16.msra.mxu0 0
    %148 = vmatprep.subr.bf16.mxu0 0
    %149 = vmatpush1.bf16.msra.mxu0 0
    %150 = vmatprep.subr.bf16.mxu0 0
    %151 = vmatpush1.bf16.msra.mxu0 0
    %152 = vmatprep.subr.bf16.mxu0 0
    %153 = vmatpush1.bf16.msra.mxu0 0
    %154 = vmatprep.subr.bf16.mxu0 0
    %155 = vmatpush1.bf16.msra.mxu0 0
    %156 = vmatprep.subr.bf16.mxu0 0
    %157 = vmatpush1.bf16.msra.mxu0 0
    %158 = vmatprep.mubr.bf16.mxu0 0
    %159 = vmatmul.mubr.bf16.gmra.mrb[0].mxu0 %v121
    %v160 = vpop.f32.mrb[0].mxu0
    %v161 = vadd.f32 %v115, %v160
    %v162 = vpop.f32.mrb[0].mxu0
    %v163 = vpop.f32.mrb[0].mxu0
    %v164 = vpop.f32.mrb[0].mxu0
    %165 = vdwg.mxu0
    %v166 = vld [vmem:[#allocation5] sm:$0xf]
    %168 = vrot.lane.b32.xlu0 %v67, 1
    %v169 = vpop.permute.xlu0 %168
    %vm171 = vcmask 7168
    %v172 = vpack.c.bf16 %v169, %v169
    %v174 = vsel %vm72, %v166, 0
    %v177 = vsel %vm76, %v172, 0
    %179 = vmatprep.subr.bf16.mxu0 0
    %180 = vmatpush1.bf16.msra.mxu0 %v177
    %181 = vmatprep.subr.bf16.mxu0 0
    %182 = vmatpush1.bf16.msra.mxu0 0
    %183 = vmatprep.subr.bf16.mxu0 0
    %184 = vmatpush1.bf16.msra.mxu0 0
    %185 = vmatprep.subr.bf16.mxu0 0
    %186 = vmatpush1.bf16.msra.mxu0 0
    %187 = vmatprep.subr.bf16.mxu0 0
    %188 = vmatpush1.bf16.msra.mxu0 0
    %189 = vmatprep.subr.bf16.mxu0 0
    %190 = vmatpush1.bf16.msra.mxu0 0
    %191 = vmatprep.subr.bf16.mxu0 0
    %192 = vmatpush1.bf16.msra.mxu0 0
    %193 = vmatprep.subr.bf16.mxu0 0
    %194 = vmatpush1.bf16.msra.mxu0 0
    %195 = vmatprep.subr.bf16.mxu0 0
    %196 = vmatpush1.bf16.msra.mxu0 0
    %197 = vmatprep.subr.bf16.mxu0 0
    %198 = vmatpush1.bf16.msra.mxu0 0
    %199 = vmatprep.subr.bf16.mxu0 0
    %200 = vmatpush1.bf16.msra.mxu0 0
    %201 = vmatprep.subr.bf16.mxu0 0
    %202 = vmatpush1.bf16.msra.mxu0 0
    %203 = vmatprep.subr.bf16.mxu0 0
    %204 = vmatpush1.bf16.msra.mxu0 0
    %205 = vmatprep.subr.bf16.mxu0 0
    %206 = vmatpush1.bf16.msra.mxu0 0
    %207 = vmatprep.subr.bf16.mxu0 0
    %208 = vmatpush1.bf16.msra.mxu0 0
    %209 = vmatprep.subr.bf16.mxu0 0
    %210 = vmatpush1.bf16.msra.mxu0 0
    %211 = vmatprep.mubr.bf16.mxu0 0
    %212 = vmatmul.mubr.bf16.gmra.mrb[0].mxu0 %v174
    %v213 = vpop.f32.mrb[0].mxu0
    %v214 = vadd.f32 0.0, %v213
    %v215 = vpop.f32.mrb[0].mxu0
    %v216 = vpop.f32.mrb[0].mxu0
    %v217 = vpop.f32.mrb[0].mxu0
    %218 = vdwg.mxu0
    %v219 = vadd.f32 %v161, %v214
    %v221 = vlaneseq
    %v222 = vshrl.u32 %v221, 7
    %v223 = vsub.s32 0, %v222
    %v224 = vrot.slane %v63, %v223
    %v226 = vmul.f32 %v219, %v224
    %v227 = vpack.c.bf16 %v226, %v226
    %228 = vst [vmem:[#allocation8] sm:$0xf] %v227
    %p229 = scmp.eq.s32.totalorder 0, 0
    // Predicated region
    $region26: #{basic_block_forward.3} parent=1 // pred_check
      %p230 = pneg %p229
    $region27: #{basic_block_forward.3} parent=1 // pred_check_branch
      %232 = sbr.rel (%p230) target = $region29
    $region28: #{basic_block_forward.3} parent=1 // pred_region
      %vm233 = vcmask 15360
      %234 = vst.msk [vmem:[#allocation9] sm:$0xff] %vm233, 0.0
    $region29: #{basic_block_forward.3} parent=1 // pred_fallthru
      _
    %v235 = vld [vmem:[#allocation9] sm:$0xff]
    %236 = vadd.xlane.f32.xlu0 %v226
    %v237 = vpop.xlane.xlu0 %236
    %v238 = vmul.f32 %v226, %v226
    %239 = vadd.xlane.f32.xlu0 %v238
    %v240 = vpop.xlane.xlu0 %239
    %v241 = vsel %vm171, %v237, %v240
    %v242 = vadd.f32 %v235, %v241
    %vm243 = vcmask 15360
    %244 = vst.msk [vmem:[#allocation9] sm:$0xff] %vm243, %v242
    // Predicated region
    $region30: #{basic_block_forward.3} parent=1 // pred_check
      _
    $region31: #{basic_block_forward.3} parent=1 // pred_check_branch
      %246 = sbr.rel (0) target = $region33
    $region32: #{basic_block_forward.3} parent=1 // pred_region
      %s247 = sadd.s32 0, 0
      %s249 = ssub.s32 64, 64
      %250 = vsyncadd [#allocation4], %s249
      %s251 = smul.addr %s247, 64
      %s252 = scalar_lea.hbm %s3, %s251
      %s254 = sshll.u32 [#allocation8], 4
      %s255 = int_to_ptr.vmem [resolvable:$true] %s254
      %257 = dma.vmem_to_hbm [thread:$0]  %s255, 64, %s252, [#allocation4]
    $region33: #{basic_block_forward.3} parent=1 // pred_fallthru
      _
    // Predicated region
    $region34: #{basic_block_forward.3} parent=1 // pred_check
      _
    $region35: #{basic_block_forward.3} parent=1 // pred_check_branch
      %259 = sbr.rel (0) target = $region37
    $region36: #{basic_block_forward.3} parent=1 // pred_region
      %s261 = ssub.s32 128, 128
      %262 = vsyncadd [#allocation10], %s261
      %s264 = sshll.u32 [#allocation9], 4
      %s265 = int_to_ptr.vmem [resolvable:$true] %s264
      %267 = dma.vmem_to_hbm [thread:$0]  %s265, 128, %s4, [#allocation10]
    $region37: #{basic_block_forward.3} parent=1 // pred_fallthru
      _
    // Predicated region
    $region38: #{basic_block_forward.3} parent=1 // pred_check
      _
    $region39: #{basic_block_forward.3} parent=1 // pred_check_branch
      %269 = sbr.rel (0) target = $region41
    $region40: #{basic_block_forward.3} parent=1 // pred_region
      %270 = dma.done [#allocation4], 64
    $region41: #{basic_block_forward.3} parent=1 // pred_fallthru
      _
    // Predicated region
    $region42: #{basic_block_forward.3} parent=1 // pred_check
      _
    $region43: #{basic_block_forward.3} parent=1 // pred_check_branch
      %272 = sbr.rel (0) target = $region45
    $region44: #{basic_block_forward.3} parent=1 // pred_region
      %273 = dma.done [#allocation10], 128
    $region45: #{basic_block_forward.3} parent=1 // pred_fallthru
      _
    %274 = vsyncpa [#allocation3], 1
    %275 = vsyncpa [#allocation6], 1
    %276 = vsyncpa [#allocation4], 1
    %277 = vsyncpa [#allocation10], 1

// kernel: basic_block_forward.4
$region0: #{basic_block_forward.4}
  #allocation0 [shape = 'u32[]', space=smem, size = 0x4, offset = 0x4, fixed_abs, tag = 'smem constant byte address 0x4 - core index']
  #allocation1 [shape = 'u32[144,128]{1,0:T(1,128)}', space=vmem, size = 0x12000, scoped, tag = 'internal scratch']
  %s0 = inlined_call_operand.hbm [shape: bf16[8,128], index: 0, kind: input, shape index: {}]
  %s1 = inlined_call_operand.hbm [shape: bf16[3,8,8], index: 1, kind: input, shape index: {}]
  %s2 = inlined_call_operand.hbm [shape: f32[1,128], index: 2, kind: input, shape index: {}]
  %s3 = inlined_call_operand.hbm [shape: f32[8,1], index: 3, kind: input, shape index: {}]
  %s4 = inlined_call_operand.hbm [shape: f32[8,1], index: 4, kind: input, shape index: {}]
  %s5 = inlined_call_operand.hbm [shape: bf16[8,128], index: 5, kind: output, shape index: {0}]
  %s6 = inlined_call_operand.hbm [shape: f32[1,8,2], index: 6, kind: output, shape index: {1}]
  %7 = xla_tuple %s5, %s6
  %s8 = sld [smem:[#allocation0]]
  $region62: #{basic_block_forward.4} parent=0
    _
  %s10 = ssub.s32 1, %s8
  %s11 = scalar_select 0, %s10, %s8
  $region1: #{basic_block_forward.4} parent=0
    #allocation2 [shape = 'u8[2048]{0}', space=vmem, size = 0x800, scoped, tag = 'input window, operand 0, single buffered']
    #allocation3 [shape = 's32[1]{0}', space=sflag, size = 0x4, scoped, tag = 'scoped memory for basic_block_forward.4']
    #allocation4 [shape = 's32[1]{0}', space=sflag, size = 0x4, scoped, tag = 'scoped memory for basic_block_forward.4']
    #allocation5 [shape = 'u8[6144]{0}', space=vmem, size = 0x1800, scoped, tag = 'input window, operand 1, single buffered']
    #allocation6 [shape = 's32[1]{0}', space=sflag, size = 0x4, scoped, tag = 'scoped memory for basic_block_forward.4']
    #allocation7 [shape = 'u8[512]{0}', space=vmem, size = 0x400, scoped, tag = 'input window, operand 2, single buffered']
    #allocation8 [shape = 'u8[4096]{0}', space=vmem, size = 0x1000, scoped, tag = 'input window, operand 3, single buffered']
    #allocation9 [shape = 's32[1]{0}', space=sflag, size = 0x4, scoped, tag = 'scoped memory for basic_block_forward.4']
    #allocation10 [shape = 'u8[4096]{0}', space=vmem, size = 0x1000, scoped, tag = 'input window, operand 4, single buffered']
    #allocation11 [shape = 'u8[2048]{0}', space=vmem, size = 0x800, scoped, tag = 'output window, operand 0, single buffered']
    #allocation12 [shape = 'u8[4096]{0}', space=vmem, size = 0x1000, scoped, tag = 'output window, operand 1, single buffered']
    #allocation13 [shape = 's32[1]{0}', space=sflag, size = 0x4, scoped, tag = 'scoped memory for basic_block_forward.4']
    %12 = vsyncpa [#allocation3], 0
    %13 = vsyncpa [#allocation6], 0
    %14 = vsyncpa [#allocation9], 0
    %15 = vsyncpa [#allocation4], 0
    %16 = vsyncpa [#allocation13], 0
    // Predicated region
    $region2: #{basic_block_forward.4} parent=1 // pred_check
      _
    $region3: #{basic_block_forward.4} parent=1 // pred_check_branch
      %18 = sbr.rel (0) target = $region5
    $region4: #{basic_block_forward.4} parent=1 // pred_region
      %s19 = sadd.s32 0, 0
      %s21 = ssub.s32 64, 64
      %22 = vsyncadd [#allocation3], %s21
      %s23 = smul.addr %s19, 64
      %s24 = scalar_lea.hbm %s0, %s23
      %s26 = sshll.u32 [#allocation2], 4
      %s27 = int_to_ptr.vmem [resolvable:$true] %s26
      %29 = dma.hbm_to_vmem [thread:$0]  %s24, 64, %s27, [#allocation3]
    $region5: #{basic_block_forward.4} parent=1 // pred_fallthru
      _
    // Predicated region
    $region6: #{basic_block_forward.4} parent=1 // pred_check
      _
    $region7: #{basic_block_forward.4} parent=1 // pred_check_branch
      %31 = sbr.rel (0) target = $region9
    $region8: #{basic_block_forward.4} parent=1 // pred_region
      %s33 = ssub.s32 192, 192
      %34 = vsyncadd [#allocation6], %s33
      %s35 = sshll.u32 [#allocation5], 4
      %s36 = int_to_ptr.vmem [resolvable:$true] %s35
      %41 = dma.hbm_to_vmem [thread:$0]  %s1, 192, %s36, [#allocation6], 64, 64, 4
    $region9: #{basic_block_forward.4} parent=1 // pred_fallthru
      _
    // Predicated region
    $region10: #{basic_block_forward.4} parent=1 // pred_check
      _
    $region11: #{basic_block_forward.4} parent=1 // pred_check_branch
      %43 = sbr.rel (0) target = $region13
    $region12: #{basic_block_forward.4} parent=1 // pred_region
      %s45 = ssub.s32 16, 16
      %46 = vsyncadd [#allocation6], %s45
      %s48 = sshll.u32 [#allocation7], 4
      %s49 = int_to_ptr.vmem [resolvable:$true] %s48
      %51 = dma.hbm_to_vmem [thread:$0]  %s2, 16, %s49, [#allocation6]
    $region13: #{basic_block_forward.4} parent=1 // pred_fallthru
      _
    // Predicated region
    $region14: #{basic_block_forward.4} parent=1 // pred_check
      _
    $region15: #{basic_block_forward.4} parent=1 // pred_check_branch
      %53 = sbr.rel (0) target = $region17
    $region16: #{basic_block_forward.4} parent=1 // pred_region
      %s55 = ssub.s32 128, 128
      %56 = vsyncadd [#allocation9], %s55
      %s58 = sshll.u32 [#allocation8], 4
      %s59 = int_to_ptr.vmem [resolvable:$true] %s58
      %61 = dma.hbm_to_vmem [thread:$0]  %s3, 128, %s59, [#allocation9]
    $region17: #{basic_block_forward.4} parent=1 // pred_fallthru
      _
    // Predicated region
    $region18: #{basic_block_forward.4} parent=1 // pred_check
      _
    $region19: #{basic_block_forward.4} parent=1 // pred_check_branch
      %63 = sbr.rel (0) target = $region21
    $region20: #{basic_block_forward.4} parent=1 // pred_region
      %s65 = ssub.s32 128, 128
      %66 = vsyncadd [#allocation9], %s65
      %s68 = sshll.u32 [#allocation10], 4
      %s69 = int_to_ptr.vmem [resolvable:$true] %s68
      %71 = dma.hbm_to_vmem [thread:$0]  %s4, 128, %s69, [#allocation9]
    $region21: #{basic_block_forward.4} parent=1 // pred_fallthru
      _
    // Predicated region
    $region22: #{basic_block_forward.4} parent=1 // pred_check
      _
    $region23: #{basic_block_forward.4} parent=1 // pred_check_branch
      %73 = sbr.rel (0) target = $region25
    $region24: #{basic_block_forward.4} parent=1 // pred_region
      %74 = dma.done [#allocation3], 64
    $region25: #{basic_block_forward.4} parent=1 // pred_fallthru
      _
    // Predicated region
    $region26: #{basic_block_forward.4} parent=1 // pred_check
      _
    $region27: #{basic_block_forward.4} parent=1 // pred_check_branch
      %76 = sbr.rel (0) target = $region29
    $region28: #{basic_block_forward.4} parent=1 // pred_region
      %77 = dma.done [#allocation6], 192
    $region29: #{basic_block_forward.4} parent=1 // pred_fallthru
      _
    // Predicated region
    $region30: #{basic_block_forward.4} parent=1 // pred_check
      _
    $region31: #{basic_block_forward.4} parent=1 // pred_check_branch
      %79 = sbr.rel (0) target = $region33
    $region32: #{basic_block_forward.4} parent=1 // pred_region
      %80 = dma.done [#allocation6], 16
    $region33: #{basic_block_forward.4} parent=1 // pred_fallthru
      _
    // Predicated region
    $region34: #{basic_block_forward.4} parent=1 // pred_check
      _
    $region35: #{basic_block_forward.4} parent=1 // pred_check_branch
      %82 = sbr.rel (0) target = $region37
    $region36: #{basic_block_forward.4} parent=1 // pred_region
      %83 = dma.done [#allocation9], 128
    $region37: #{basic_block_forward.4} parent=1 // pred_fallthru
      _
    // Predicated region
    $region38: #{basic_block_forward.4} parent=1 // pred_check
      _
    $region39: #{basic_block_forward.4} parent=1 // pred_check_branch
      %85 = sbr.rel (0) target = $region41
    $region40: #{basic_block_forward.4} parent=1 // pred_region
      %86 = dma.done [#allocation9], 128
    $region41: #{basic_block_forward.4} parent=1 // pred_fallthru
      _
    %s87 = sadd.s32 0, 0
    %s88 = sadd.s32 0, 0
    %v90 = vld [vmem:[#allocation7] sm:$0x1]
    %v91 = vld [vmem:[#allocation2] sm:$0xf]
    %v92 = vunpack.c.l.bf16 %v91
    %v93 = vld [vmem:[#allocation8] sm:$0xff]
    %95 = vset.pattern.permute.xlu0 0
    %96 = vperm.xlu0 %95, %v93
    %v97 = vpop.permute.xlu0 %96
    %v99 = vmul.f32 %v92, %v97
    %v100 = vld [vmem:[#allocation10] sm:$0xff]
    %102 = vset.pattern.permute.xlu0 0
    %103 = vperm.xlu0 %102, %v100
    %v104 = vpop.permute.xlu0 %103
    %v106 = vadd.f32 %v99, %v104
    %v107 = vmax.f32 %v106, 0.0
    %v109 = vlaneseq
    %v110 = vshrl.u32 %v109, 7
    %v111 = vsub.s32 0, %v110
    %v112 = vrot.slane %v90, %v111
    %v114 = vmul.f32 %v107, %v112
    %s115 = scalar_lea.vmem [#allocation5], 4
    %v116 = vld [vmem:[%s115] sm:$0xf]
    %v117 = vpack.c.bf16 %v114, %v114
    %v118 = vld [vmem:[#allocation5] sm:$0xf]
    %120 = vrot.lane.b32.xlu0 %v114, 1
    %v121 = vpop.permute.xlu0 %120
    %vm123 = vcmask 7168
    %v124 = vpack.c.bf16 %v121, %v121
    %vm125 = vcmask 64512
    %v127 = vsel %vm125, %v118, 0
    %vm129 = vcmask 1043456
    %v131 = vsel %vm129, %v124, 0
    %133 = vmatprep.subr.bf16.mxu0 0
    %134 = vmatpush1.bf16.msra.mxu0 %v131
    %135 = vmatprep.subr.bf16.mxu0 0
    %136 = vmatpush1.bf16.msra.mxu0 0
    %137 = vmatprep.subr.bf16.mxu0 0
    %138 = vmatpush1.bf16.msra.mxu0 0
    %139 = vmatprep.subr.bf16.mxu0 0
    %140 = vmatpush1.bf16.msra.mxu0 0
    %141 = vmatprep.subr.bf16.mxu0 0
    %142 = vmatpush1.bf16.msra.mxu0 0
    %143 = vmatprep.subr.bf16.mxu0 0
    %144 = vmatpush1.bf16.msra.mxu0 0
    %145 = vmatprep.subr.bf16.mxu0 0
    %146 = vmatpush1.bf16.msra.mxu0 0
    %147 = vmatprep.subr.bf16.mxu0 0
    %148 = vmatpush1.bf16.msra.mxu0 0
    %149 = vmatprep.subr.bf16.mxu0 0
    %150 = vmatpush1.bf16.msra.mxu0 0
    %151 = vmatprep.subr.bf16.mxu0 0
    %152 = vmatpush1.bf16.msra.mxu0 0
    %153 = vmatprep.subr.bf16.mxu0 0
    %154 = vmatpush1.bf16.msra.mxu0 0
    %155 = vmatprep.subr.bf16.mxu0 0
    %156 = vmatpush1.bf16.msra.mxu0 0
    %157 = vmatprep.subr.bf16.mxu0 0
    %158 = vmatpush1.bf16.msra.mxu0 0
    %159 = vmatprep.subr.bf16.mxu0 0
    %160 = vmatpush1.bf16.msra.mxu0 0
    %161 = vmatprep.subr.bf16.mxu0 0
    %162 = vmatpush1.bf16.msra.mxu0 0
    %163 = vmatprep.subr.bf16.mxu0 0
    %164 = vmatpush1.bf16.msra.mxu0 0
    %165 = vmatprep.mubr.bf16.mxu0 0
    %166 = vmatmul.mubr.bf16.gmra.mrb[0].mxu0 %v127
    %v167 = vpop.f32.mrb[0].mxu0
    %v168 = vadd.f32 0.0, %v167
    %v169 = vpop.f32.mrb[0].mxu0
    %v170 = vpop.f32.mrb[0].mxu0
    %v171 = vpop.f32.mrb[0].mxu0
    %172 = vdwg.mxu0
    %v174 = vsel %vm125, %v116, 0
    %v177 = vsel %vm129, %v117, 0
    %179 = vmatprep.subr.bf16.mxu0 0
    %180 = vmatpush1.bf16.msra.mxu0 %v177
    %181 = vmatprep.subr.bf16.mxu0 0
    %182 = vmatpush1.bf16.msra.mxu0 0
    %183 = vmatprep.subr.bf16.mxu0 0
    %184 = vmatpush1.bf16.msra.mxu0 0
    %185 = vmatprep.subr.bf16.mxu0 0
    %186 = vmatpush1.bf16.msra.mxu0 0
    %187 = vmatprep.subr.bf16.mxu0 0
    %188 = vmatpush1.bf16.msra.mxu0 0
    %189 = vmatprep.subr.bf16.mxu0 0
    %190 = vmatpush1.bf16.msra.mxu0 0
    %191 = vmatprep.subr.bf16.mxu0 0
    %192 = vmatpush1.bf16.msra.mxu0 0
    %193 = vmatprep.subr.bf16.mxu0 0
    %194 = vmatpush1.bf16.msra.mxu0 0
    %195 = vmatprep.subr.bf16.mxu0 0
    %196 = vmatpush1.bf16.msra.mxu0 0
    %197 = vmatprep.subr.bf16.mxu0 0
    %198 = vmatpush1.bf16.msra.mxu0 0
    %199 = vmatprep.subr.bf16.mxu0 0
    %200 = vmatpush1.bf16.msra.mxu0 0
    %201 = vmatprep.subr.bf16.mxu0 0
    %202 = vmatpush1.bf16.msra.mxu0 0
    %203 = vmatprep.subr.bf16.mxu0 0
    %204 = vmatpush1.bf16.msra.mxu0 0
    %205 = vmatprep.subr.bf16.mxu0 0
    %206 = vmatpush1.bf16.msra.mxu0 0
    %207 = vmatprep.subr.bf16.mxu0 0
    %208 = vmatpush1.bf16.msra.mxu0 0
    %209 = vmatprep.subr.bf16.mxu0 0
    %210 = vmatpush1.bf16.msra.mxu0 0
    %211 = vmatprep.mubr.bf16.mxu0 0
    %212 = vmatmul.mubr.bf16.gmra.mrb[0].mxu0 %v174
    %v213 = vpop.f32.mrb[0].mxu0
    %v214 = vadd.f32 %v168, %v213
    %v215 = vpop.f32.mrb[0].mxu0
    %v216 = vpop.f32.mrb[0].mxu0
    %v217 = vpop.f32.mrb[0].mxu0
    %218 = vdwg.mxu0
    %s219 = scalar_lea.vmem [#allocation5], 8
    %v220 = vld [vmem:[%s219] sm:$0xf]
    %221 = vrot.lane.b32.xlu0 %v114, 127
    %v222 = vpop.permute.xlu0 %221
    %v224 = vpack.c.bf16 %v222, %v222
    %v226 = vsel %vm125, %v220, 0
    %v229 = vsel %vm129, %v224, 0
    %231 = vmatprep.subr.bf16.mxu0 0
    %232 = vmatpush1.bf16.msra.mxu0 %v229
    %233 = vmatprep.subr.bf16.mxu0 0
    %234 = vmatpush1.bf16.msra.mxu0 0
    %235 = vmatprep.subr.bf16.mxu0 0
    %236 = vmatpush1.bf16.msra.mxu0 0
    %237 = vmatprep.subr.bf16.mxu0 0
    %238 = vmatpush1.bf16.msra.mxu0 0
    %239 = vmatprep.subr.bf16.mxu0 0
    %240 = vmatpush1.bf16.msra.mxu0 0
    %241 = vmatprep.subr.bf16.mxu0 0
    %242 = vmatpush1.bf16.msra.mxu0 0
    %243 = vmatprep.subr.bf16.mxu0 0
    %244 = vmatpush1.bf16.msra.mxu0 0
    %245 = vmatprep.subr.bf16.mxu0 0
    %246 = vmatpush1.bf16.msra.mxu0 0
    %247 = vmatprep.subr.bf16.mxu0 0
    %248 = vmatpush1.bf16.msra.mxu0 0
    %249 = vmatprep.subr.bf16.mxu0 0
    %250 = vmatpush1.bf16.msra.mxu0 0
    %251 = vmatprep.subr.bf16.mxu0 0
    %252 = vmatpush1.bf16.msra.mxu0 0
    %253 = vmatprep.subr.bf16.mxu0 0
    %254 = vmatpush1.bf16.msra.mxu0 0
    %255 = vmatprep.subr.bf16.mxu0 0
    %256 = vmatpush1.bf16.msra.mxu0 0
    %257 = vmatprep.subr.bf16.mxu0 0
    %258 = vmatpush1.bf16.msra.mxu0 0
    %259 = vmatprep.subr.bf16.mxu0 0
    %260 = vmatpush1.bf16.msra.mxu0 0
    %261 = vmatprep.subr.bf16.mxu0 0
    %262 = vmatpush1.bf16.msra.mxu0 0
    %263 = vmatprep.mubr.bf16.mxu0 0
    %264 = vmatmul.mubr.bf16.gmra.mrb[0].mxu0 %v226
    %v265 = vpop.f32.mrb[0].mxu0
    %v266 = vadd.f32 0.0, %v265
    %v267 = vpop.f32.mrb[0].mxu0
    %v268 = vpop.f32.mrb[0].mxu0
    %v269 = vpop.f32.mrb[0].mxu0
    %270 = vdwg.mxu0
    %v271 = vadd.f32 %v214, %v266
    %v272 = vmul.f32 %v271, %v112
    %v273 = vpack.c.bf16 %v272, %v272
    %274 = vst [vmem:[#allocation11] sm:$0xf] %v273
    %p275 = scmp.eq.s32.totalorder 0, 0
    // Predicated region
    $region42: #{basic_block_forward.4} parent=1 // pred_check
      %p276 = pneg %p275
    $region43: #{basic_block_forward.4} parent=1 // pred_check_branch
      %278 = sbr.rel (%p276) target = $region45
    $region44: #{basic_block_forward.4} parent=1 // pred_region
      %vm279 = vcmask 15360
      %280 = vst.msk [vmem:[#allocation12] sm:$0xff] %vm279, 0.0
    $region45: #{basic_block_forward.4} parent=1 // pred_fallthru
      _
    %v281 = vld [vmem:[#allocation12] sm:$0xff]
    %282 = vadd.xlane.f32.xlu0 %v272
    %v283 = vpop.xlane.xlu0 %282
    %v284 = vmul.f32 %v272, %v272
    %285 = vadd.xlane.f32.xlu0 %v284
    %v286 = vpop.xlane.xlu0 %285
    %v287 = vsel %vm123, %v283, %v286
    %v288 = vadd.f32 %v281, %v287
    %vm289 = vcmask 15360
    %290 = vst.msk [vmem:[#allocation12] sm:$0xff] %vm289, %v288
    // Predicated region
    $region46: #{basic_block_forward.4} parent=1 // pred_check
      _
    $region47: #{basic_block_forward.4} parent=1 // pred_check_branch
      %292 = sbr.rel (0) target = $region49
    $region48: #{basic_block_forward.4} parent=1 // pred_region
      %s293 = sadd.s32 0, 0
      %s295 = ssub.s32 64, 64
      %296 = vsyncadd [#allocation4], %s295
      %s297 = smul.addr %s293, 64
      %s298 = scalar_lea.hbm %s5, %s297
      %s300 = sshll.u32 [#allocation11], 4
      %s301 = int_to_ptr.vmem [resolvable:$true] %s300
      %303 = dma.vmem_to_hbm [thread:$0]  %s301, 64, %s298, [#allocation4]
    $region49: #{basic_block_forward.4} parent=1 // pred_fallthru
      _
    // Predicated region
    $region50: #{basic_block_forward.4} parent=1 // pred_check
      _
    $region51: #{basic_block_forward.4} parent=1 // pred_check_branch
      %305 = sbr.rel (0) target = $region53
    $region52: #{basic_block_forward.4} parent=1 // pred_region
      %s307 = ssub.s32 128, 128
      %308 = vsyncadd [#allocation13], %s307
      %s310 = sshll.u32 [#allocation12], 4
      %s311 = int_to_ptr.vmem [resolvable:$true] %s310
      %313 = dma.vmem_to_hbm [thread:$0]  %s311, 128, %s6, [#allocation13]
    $region53: #{basic_block_forward.4} parent=1 // pred_fallthru
      _
    // Predicated region
    $region54: #{basic_block_forward.4} parent=1 // pred_check
      _
    $region55: #{basic_block_forward.4} parent=1 // pred_check_branch
      %315 = sbr.rel (0) target = $region57
    $region56: #{basic_block_forward.4} parent=1 // pred_region
      %316 = dma.done [#allocation4], 64
    $region57: #{basic_block_forward.4} parent=1 // pred_fallthru
      _
    // Predicated region
    $region58: #{basic_block_forward.4} parent=1 // pred_check
      _
    $region59: #{basic_block_forward.4} parent=1 // pred_check_branch
      %318 = sbr.rel (0) target = $region61
    $region60: #{basic_block_forward.4} parent=1 // pred_region
      %319 = dma.done [#allocation13], 128
    $region61: #{basic_block_forward.4} parent=1 // pred_fallthru
      _
    %320 = vsyncpa [#allocation3], 1
    %321 = vsyncpa [#allocation6], 1
    %322 = vsyncpa [#allocation9], 1
    %323 = vsyncpa [#allocation4], 1
    %324 = vsyncpa [#allocation13], 1

</llo_original>
